<compile_context>
chip_gen: v7x
topology: tpu7x:2x2x1
jax: 0.10.0
libtpu: 0.0.40
codegen_flags: <defaults>
</compile_context>

<pallas_src>
import functools

import numpy as np

import jax
import jax.numpy as jnp
from jax import lax
from jax.experimental import pallas as pl
from jax.experimental.pallas import tpu as pltpu

_INV_SQRT2 = 0.7071067811865476        # 1/sqrt(2), exact (erf) GELU
_SQRT_2_OVER_PI = 0.7978845608028654   # sqrt(2/pi), tanh-approx GELU


def _gelu(h, approx):
    if approx:
        # tanh lowers to the EUP (separate VLIW slot) instead of the VALU
        # erf polynomial -- preferred on v6e/v7x when tolerance allows.
        return 0.5 * h * (1.0 + jnp.tanh(_SQRT_2_OVER_PI * (h + 0.044715 * h * h * h)))
    return 0.5 * h * (1.0 + lax.erf(h * _INV_SQRT2))


def _mlp_kernel(x_ref, w1_ref, b1_ref, w2_ref, b2_ref, o_ref, acc_ref,
                *, tk, n_chunks, compute_dtype, gelu_approx):
    # Cast the activation tile to the MXU compute dtype in VMEM (x arrives
    # in its native dtype; no wrapper-side HBM cast pass).
    x = x_ref[...].astype(compute_dtype)

    def chunk_contrib(w1c, b1c, w2c):
        # First linear (partial over hidden): bf16 operands, f32 accumulate.
        h = jnp.dot(x, w1c, preferred_element_type=jnp.float32) + b1c
        h = _gelu(h, gelu_approx)                       # f32 bias + GELU
        # Partial second linear; cast the chunk back to the compute dtype
        # right before the dot so the f32 and bf16 copies only coexist at
        # [tm, tk], never [tm, hidden].
        return jnp.dot(h.astype(compute_dtype), w2c,
                       preferred_element_type=jnp.float32)

    if n_chunks == 1:
        y = chunk_contrib(w1_ref[...], b1_ref[...], w2_ref[...])
    else:
        acc_ref[...] = jnp.zeros_like(acc_ref)

        def body(c, carry):
            off = pl.multiple_of(c * tk, tk)            # lane/sublane aligned
            acc_ref[...] += chunk_contrib(
                w1_ref[:, pl.ds(off, tk)],
                b1_ref[:, pl.ds(off, tk)],
                w2_ref[pl.ds(off, tk), :])
            return carry

        lax.fori_loop(0, n_chunks, body, 0, unroll=True)
        y = acc_ref[...]

    o_ref[...] = (y + b2_ref[...]).astype(o_ref.dtype)


def _pick_row_tile(m):
    """Bounded, MXU-aligned row tile that keeps the grid splittable."""
    if m <= 512:
        return m                     # single grid step for tiny problems
    if m >= 8192:
        return 1024                  # long MXU streams, fewer step overheads
    # Keep >= 4 grid steps (>= 2 per TensorCore on v7x) so the "parallel"
    # axis can actually shard across both cores.
    for tm in (512, 256, 128):
        if pl.cdiv(m, tm) >= 4:
            return tm
    return 128


def _pick_hidden_chunk(hidden):
    """MXU/lane-aligned chunk of the hidden dim that divides it evenly."""
    for tk in (512, 256, 128):
        if hidden % tk == 0:
            return tk
    return hidden                    # small / odd hidden: single chunk


def _vmem_budget_bytes():
    """Per-core VMEM budget with ~12% headroom for compiler scratch/DMA."""
    try:
        cap = getattr(pltpu.get_tpu_info(), "vmem_capacity_bytes", None)
    except Exception:
        cap = None
    if not cap:
        cap = 64 << 20               # conservative (v7x per-TC) fallback
    return int(cap) * 7 // 8         # ~56 MiB on v7x, ~112 MiB on v5e/v6e


def prepare_params(w1, b1, w2, b2, compute_dtype=jnp.bfloat16):
    """Cast weights to the MXU compute dtype ONCE (at init, not per call)."""
    return (w1.astype(compute_dtype),
            b1.reshape(1, -1).astype(jnp.float32),
            w2.astype(compute_dtype),
            b2.reshape(1, -1).astype(jnp.float32))


@functools.partial(jax.jit,
                   static_argnames=("tm", "tk", "compute_dtype", "gelu_approx"))
def mlp_block(x, w1, b1, w2, b2, *, tm=None, tk=None,
              compute_dtype=jnp.bfloat16, gelu_approx=False):
    """x: [batch, seq, dim] -> [batch, seq, dim].

    Pass weights already cast via prepare_params() to avoid a per-call cast.
    compute_dtype feeds the MXU (accumulation is always f32); use
    jnp.float32 for parity testing against an f32 torch reference.
    """
    batch, seq, dim = x.shape
    hidden = w1.shape[1]
    m = batch * seq
    if tm is None:
        tm = _pick_row_tile(m)
    if tk is None:
        tk = _pick_hidden_chunk(hidden)
    if hidden % tk != 0:
        tk = hidden                  # fall back to a single chunk
    n_chunks = hidden // tk

    out_dtype = x.dtype
    x2d = x.reshape(m, dim)          # native dtype; cast happens in-kernel

    # Fallback casts are no-ops when params came from prepare_params().
    if w1.dtype != compute_dtype:
        w1 = w1.astype(compute_dtype)
    if w2.dtype != compute_dtype:
        w2 = w2.astype(compute_dtype)
    b1_2d = b1.reshape(1, hidden).astype(jnp.float32)
    b2_2d = b2.reshape(1, dim).astype(jnp.float32)

    grid = (pl.cdiv(m, tm),)

    # VMEM budget from the actual working set.
    xbytes = np.dtype(x.dtype).itemsize
    obytes = np.dtype(out_dtype).itemsize
    cbytes = np.dtype(compute_dtype).itemsize
    est = (
        2 * tm * dim * xbytes            # x tiles (double-buffered)
        + 2 * tm * dim * obytes          # out tiles (double-buffered)
        + dim * hidden * cbytes          # resident w1
        + hidden * dim * cbytes          # resident w2
        + 8 * (hidden + dim) * 4         # biases (sublane-padded, f32)
        + tm * dim * 4                   # f32 accumulator scratch
        + tm * dim * cbytes              # x cast copy (compute dtype)
        + tm * tk * (4 + cbytes)         # per-chunk f32 h + cast copy
    )
    vmem_limit = int(min(max(int(1.5 * est) + (4 << 20), 32 << 20),
                         _vmem_budget_bytes()))

    cost = pl.CostEstimate(
        flops=4 * m * dim * hidden,          # two matmuls
        transcendentals=m * hidden,          # one erf/tanh per hidden elem
        bytes_accessed=(m * dim * (xbytes + obytes)
                        + 2 * dim * hidden * cbytes
                        + (hidden + dim) * 4),
    )

    kernel = functools.partial(_mlp_kernel, tk=tk, n_chunks=n_chunks,
                               compute_dtype=compute_dtype,
                               gelu_approx=gelu_approx)

    out2d = pl.pallas_call(
        kernel,
        out_shape=jax.ShapeDtypeStruct((m, dim), out_dtype),
        grid_spec=pltpu.PrefetchScalarGridSpec(
            num_scalar_prefetch=0,
            grid=grid,
            in_specs=[
                pl.BlockSpec((tm, dim), lambda i: (i, 0)),          # x rows
                pl.BlockSpec(memory_space=pltpu.MemorySpace.VMEM),  # w1
                pl.BlockSpec(memory_space=pltpu.MemorySpace.VMEM),  # b1
                pl.BlockSpec(memory_space=pltpu.MemorySpace.VMEM),  # w2
                pl.BlockSpec(memory_space=pltpu.MemorySpace.VMEM),  # b2
            ],
            out_specs=pl.BlockSpec((tm, dim), lambda i: (i, 0)),
            scratch_shapes=[pltpu.VMEM((tm, dim), jnp.float32)],    # f32 acc
        ),
        compiler_params=pltpu.CompilerParams(
            dimension_semantics=("parallel",),
            vmem_limit_bytes=vmem_limit,
        ),
        cost_estimate=cost,
    )(x2d, w1, b1_2d, w2, b2_2d)

    return out2d.reshape(batch, seq, dim)


def init_params(key, dim, expansion_factor):
    """Deterministic init mirroring nn.Linear (uniform +-1/sqrt(fan_in))."""
    hidden = int(expansion_factor * dim)
    k1, k2, k3, k4 = jax.random.split(key, 4)
    lim1 = 1.0 / jnp.sqrt(dim)
    lim2 = 1.0 / jnp.sqrt(hidden)
    # Stored as [in, out] (transpose of torch's [out, in]) so the kernel
    # computes x @ W directly.
    w1 = jax.random.uniform(k1, (dim, hidden), jnp.float32, -lim1, lim1)
    b1 = jax.random.uniform(k2, (hidden,), jnp.float32, -lim1, lim1)
    w2 = jax.random.uniform(k3, (hidden, dim), jnp.float32, -lim2, lim2)
    b2 = jax.random.uniform(k4, (dim,), jnp.float32, -lim2, lim2)
    return w1, b1, w2, b2


def _reference(x, w1, b1, w2, b2, compute_dtype=jnp.bfloat16):
    """Pure-JAX reference mirroring the kernel's compute-dtype policy."""
    cd = compute_dtype
    batch, seq, dim = x.shape
    x2d = x.reshape(batch * seq, dim).astype(cd)
    h = jnp.dot(x2d, w1.astype(cd), preferred_element_type=jnp.float32)
    h = h + b1.reshape(1, -1).astype(jnp.float32)
    h = 0.5 * h * (1.0 + lax.erf(h * _INV_SQRT2))
    y = jnp.dot(h.astype(cd), w2.astype(cd), preferred_element_type=jnp.float32)
    y = y + b2.reshape(1, -1).astype(jnp.float32)
    return y.astype(x.dtype).reshape(batch, seq, dim)


if __name__ == "__main__":
    key = jax.random.PRNGKey(0)
    kx, kp = jax.random.split(key)

    batch, seq, dim = 2, 8, 128      # dim multiple of 128 -> lane-dense output
    expansion_factor = 4             # hidden = 512

    x = jax.random.normal(kx, (batch, seq, dim), jnp.float32)
    w1, b1, w2, b2 = init_params(kp, dim, expansion_factor)

    # Cast weights to the MXU compute dtype ONCE (not inside every call).
    pw1, pb1, pw2, pb2 = prepare_params(w1, b1, w2, b2, jnp.bfloat16)

    ref = _reference(x, w1, b1, w2, b2)

    # Default path: single grid step, single hidden chunk.
    out = jax.block_until_ready(mlp_block(x, pw1, pb1, pw2, pb2))
    assert out.shape == x.shape
    err = float(jnp.max(jnp.abs(out - ref)))
    assert jnp.allclose(out, ref, atol=2e-3, rtol=2e-3), err

    # Exercise the multi-step grid and the chunked-hidden accumulation path.
    out2 = jax.block_until_ready(mlp_block(x, pw1, pb1, pw2, pb2, tm=8, tk=128))
    err2 = float(jnp.max(jnp.abs(out2 - ref)))
    assert jnp.allclose(out2, ref, atol=2e-3, rtol=2e-3), err2

    print("KERNEL_OK")
</pallas_src>

<mosaic_0001>
module attributes {stable_mosaic.version = 11 : i64} {
  func.func @_mlp_kernel(%arg0: i32, %arg1: memref<16x128xf32, #tpu.memory_space<vmem>>, %arg2: memref<128x512xbf16, #tpu.memory_space<vmem>>, %arg3: memref<1x512xf32, #tpu.memory_space<vmem>>, %arg4: memref<512x128xbf16, #tpu.memory_space<vmem>>, %arg5: memref<1x128xf32, #tpu.memory_space<vmem>>, %arg6: memref<16x128xf32, #tpu.memory_space<vmem>>, %arg7: memref<16x128xf32, #tpu.memory_space<vmem>>) attributes {dimension_semantics = [#tpu.dimension_semantics<parallel>], iteration_bounds = array<i64: 1>, scalar_prefetch = 0 : i64, scratch_operands = 1 : i64, tpu.core_type = #tpu.core_type<tc>, window_params = [{transform_indices = @transform_0, window_bounds = array<i64: 16, 128>}, {pipeline_mode = #tpu.pipeline_mode<synchronous>, transform_indices = @transform_1, window_bounds = array<i64: 128, 512>}, {pipeline_mode = #tpu.pipeline_mode<synchronous>, transform_indices = @transform_2, window_bounds = array<i64: 1, 512>}, {pipeline_mode = #tpu.pipeline_mode<synchronous>, transform_indices = @transform_3, window_bounds = array<i64: 512, 128>}, {pipeline_mode = #tpu.pipeline_mode<synchronous>, transform_indices = @transform_4, window_bounds = array<i64: 1, 128>}, {transform_indices = @transform_5, window_bounds = array<i64: 16, 128>}]} {
    %c0 = arith.constant 0 : index
    %c0_0 = arith.constant 0 : index
    %0 = vector.load %arg1[%c0, %c0_0] : memref<16x128xf32, #tpu.memory_space<vmem>>, vector<16x128xf32>
    %1 = arith.truncf %0 : vector<16x128xf32> to vector<16x128xbf16>
    %c0_1 = arith.constant 0 : index
    %c0_2 = arith.constant 0 : index
    %2 = vector.load %arg2[%c0_1, %c0_2] : memref<128x512xbf16, #tpu.memory_space<vmem>>, vector<128x512xbf16>
    %c0_3 = arith.constant 0 : index
    %c0_4 = arith.constant 0 : index
    %3 = vector.load %arg3[%c0_3, %c0_4] : memref<1x512xf32, #tpu.memory_space<vmem>>, vector<1x512xf32>
    %c0_5 = arith.constant 0 : index
    %c0_6 = arith.constant 0 : index
    %4 = vector.load %arg4[%c0_5, %c0_6] : memref<512x128xbf16, #tpu.memory_space<vmem>>, vector<512x128xbf16>
    %cst = arith.constant dense<0.000000e+00> : vector<16x512xf32>
    %5 = tpu.matmul %1, %2, %cst {dimension_numbers = #tpu.dot_dimension_numbers<[1], [0], [0], [1], [0, 0, 1, 1], [], []>} : vector<16x128xbf16>, vector<128x512xbf16>, vector<16x512xf32> -> vector<16x512xf32>
    %6 = vector.broadcast %3 : vector<1x512xf32> to vector<16x512xf32>
    %7 = arith.addf %5, %6 : vector<16x512xf32>
    %cst_7 = arith.constant 5.000000e-01 : f32
    %8 = vector.broadcast %cst_7 : f32 to vector<16x512xf32>
    %9 = arith.mulf %8, %7 : vector<16x512xf32>
    %cst_8 = arith.constant 0.707106769 : f32
    %10 = vector.broadcast %cst_8 : f32 to vector<16x512xf32>
    %11 = arith.mulf %7, %10 : vector<16x512xf32>
    %12 = math.erf %11 : vector<16x512xf32>
    %cst_9 = arith.constant 1.000000e+00 : f32
    %13 = vector.broadcast %cst_9 : f32 to vector<16x512xf32>
    %14 = arith.addf %13, %12 : vector<16x512xf32>
    %15 = arith.mulf %9, %14 : vector<16x512xf32>
    %16 = arith.truncf %15 : vector<16x512xf32> to vector<16x512xbf16>
    %cst_10 = arith.constant dense<0.000000e+00> : vector<16x128xf32>
    %17 = tpu.matmul %16, %4, %cst_10 {dimension_numbers = #tpu.dot_dimension_numbers<[1], [0], [0], [1], [0, 0, 1, 1], [], []>} : vector<16x512xbf16>, vector<512x128xbf16>, vector<16x128xf32> -> vector<16x128xf32>
    %c0_11 = arith.constant 0 : index
    %c0_12 = arith.constant 0 : index
    %18 = vector.load %arg5[%c0_11, %c0_12] : memref<1x128xf32, #tpu.memory_space<vmem>>, vector<1x128xf32>
    %19 = vector.broadcast %18 : vector<1x128xf32> to vector<16x128xf32>
    %20 = arith.addf %17, %19 : vector<16x128xf32>
    %c0_13 = arith.constant 0 : index
    %c0_14 = arith.constant 0 : index
    %21 = vector.load %arg6[%c0_13, %c0_14] : memref<16x128xf32, #tpu.memory_space<vmem>>, vector<16x128xf32>
    tpu.vector_store %arg6[%c0_13, %c0_14], %20 {strides = array<i32>} : memref<16x128xf32, #tpu.memory_space<vmem>>, vector<16x128xf32>,
    return
  }
  func.func @transform_0(%arg0: i32) -> (i32, i32) {
    %c0_i32 = arith.constant 0 : i32
    %c0_i32_0 = arith.constant 0 : i32
    return %arg0, %c0_i32 : i32, i32
  }
  func.func @transform_1(%arg0: i32) -> (i32, i32) {
    %c0_i32 = arith.constant 0 : i32
    %c0_i32_0 = arith.constant 0 : i32
    %c0_i32_1 = arith.constant 0 : i32
    return %c0_i32, %c0_i32_0 : i32, i32
  }
  func.func @transform_2(%arg0: i32) -> (i32, i32) {
    %c0_i32 = arith.constant 0 : i32
    %c0_i32_0 = arith.constant 0 : i32
    %c0_i32_1 = arith.constant 0 : i32
    return %c0_i32, %c0_i32_0 : i32, i32
  }
  func.func @transform_3(%arg0: i32) -> (i32, i32) {
    %c0_i32 = arith.constant 0 : i32
    %c0_i32_0 = arith.constant 0 : i32
    %c0_i32_1 = arith.constant 0 : i32
    return %c0_i32, %c0_i32_0 : i32, i32
  }
  func.func @transform_4(%arg0: i32) -> (i32, i32) {
    %c0_i32 = arith.constant 0 : i32
    %c0_i32_0 = arith.constant 0 : i32
    %c0_i32_1 = arith.constant 0 : i32
    return %c0_i32, %c0_i32_0 : i32, i32
  }
  func.func @transform_5(%arg0: i32) -> (i32, i32) {
    %c0_i32 = arith.constant 0 : i32
    %c0_i32_0 = arith.constant 0 : i32
    return %arg0, %c0_i32 : i32, i32
  }
}

</mosaic_0001>

<llo_original>
// kernel: mlp_block.1
$region0: #{mlp_block.1}
  #allocation0 [shape = 'u32[]', space=smem, size = 0x4, offset = 0x4, fixed_abs, tag = 'smem constant byte address 0x4 - core index']
  #allocation1 [shape = 'u32[144,128]{1,0:T(1,128)}', space=vmem, size = 0x12000, scoped, tag = 'internal scratch']
  #allocation2 [shape = 'f32[16,128]{1,0:T(8,128)}', space=vmem, size = 0x2000, scoped, tag = 'scratch operand']
  %s0 = inlined_call_operand.hbm [shape: f32[16,128], index: 0, kind: input, shape index: {}]
  %s1 = inlined_call_operand.hbm [shape: bf16[128,512], index: 1, kind: input, shape index: {}]
  %s2 = inlined_call_operand.vmem [shape: f32[1,512], index: 2, kind: input, shape index: {}]
  %s3 = inlined_call_operand.hbm [shape: bf16[512,128], index: 3, kind: input, shape index: {}]
  %s4 = inlined_call_operand.vmem [shape: f32[1,128], index: 4, kind: input, shape index: {}]
  %s5 = inlined_call_operand.hbm [shape: f32[16,128], index: 5, kind: output, shape index: {}]
  %s6 = sld [smem:[#allocation0]]
  $region42: #{mlp_block.1} parent=0
    _
  %s8 = ssub.s32 1, %s6
  %s9 = scalar_select 0, %s8, %s6
  $region1: #{mlp_block.1} parent=0
    #allocation3 [shape = 'u8[8192]{0}', space=vmem, size = 0x2000, scoped, tag = 'input window, operand 0, single buffered']
    #allocation4 [shape = 's32[1]{0}', space=sflag, size = 0x4, scoped, tag = 'scoped memory for mlp_block.1']
    #allocation5 [shape = 's32[1]{0}', space=sflag, size = 0x4, scoped, tag = 'scoped memory for mlp_block.1']
    #allocation6 [shape = 'u8[131072]{0}', space=vmem, size = 0x20000, scoped, tag = 'input window, operand 1, single buffered']
    #allocation7 [shape = 's32[1]{0}', space=sflag, size = 0x4, scoped, tag = 'scoped memory for mlp_block.1']
    #allocation8 [shape = 'u8[131072]{0}', space=vmem, size = 0x20000, scoped, tag = 'input window, operand 3, single buffered']
    #allocation9 [shape = 'u8[8192]{0}', space=vmem, size = 0x2000, scoped, tag = 'output window, operand 0, single buffered']
    %10 = vsyncpa [#allocation4], 0
    %11 = vsyncpa [#allocation7], 0
    %12 = vsyncpa [#allocation5], 0
    // Predicated region
    $region2: #{mlp_block.1} parent=1 // pred_check
      _
    $region3: #{mlp_block.1} parent=1 // pred_check_branch
      %14 = sbr.rel (0) target = $region5
    $region4: #{mlp_block.1} parent=1 // pred_region
      %s16 = ssub.s32 256, 256
      %17 = vsyncadd [#allocation4], %s16
      %s18 = sshll.u32 [#allocation3], 4
      %s19 = int_to_ptr.vmem [resolvable:$true] %s18
      %24 = dma.hbm_to_vmem [thread:$0]  %s0, 256, %s19, [#allocation4], 128, 128, 8
    $region5: #{mlp_block.1} parent=1 // pred_fallthru
      _
    // Predicated region
    $region6: #{mlp_block.1} parent=1 // pred_check
      _
    $region7: #{mlp_block.1} parent=1 // pred_check_branch
      %26 = sbr.rel (0) target = $region9
    $region8: #{mlp_block.1} parent=1 // pred_region
      %s28 = ssub.s32 4096, 4096
      %29 = vsyncadd [#allocation7], %s28
      %s30 = sshll.u32 [#allocation6], 4
      %s31 = int_to_ptr.vmem [resolvable:$true] %s30
      %36 = dma.hbm_to_vmem [thread:$0]  %s1, 4096, %s31, [#allocation7], 256, 256, 16
    $region9: #{mlp_block.1} parent=1 // pred_fallthru
      _
    // Predicated region
    $region10: #{mlp_block.1} parent=1 // pred_check
      _
    $region11: #{mlp_block.1} parent=1 // pred_check_branch
      %38 = sbr.rel (0) target = $region13
    $region12: #{mlp_block.1} parent=1 // pred_region
      _
    $region13: #{mlp_block.1} parent=1 // pred_fallthru
      _
    // Predicated region
    $region14: #{mlp_block.1} parent=1 // pred_check
      _
    $region15: #{mlp_block.1} parent=1 // pred_check_branch
      %40 = sbr.rel (0) target = $region17
    $region16: #{mlp_block.1} parent=1 // pred_region
      %s42 = ssub.s32 4096, 4096
      %43 = vsyncadd [#allocation7], %s42
      %s44 = sshll.u32 [#allocation8], 4
      %s45 = int_to_ptr.vmem [resolvable:$true] %s44
      %50 = dma.hbm_to_vmem [thread:$0]  %s3, 4096, %s45, [#allocation7], 64, 64, 4
    $region17: #{mlp_block.1} parent=1 // pred_fallthru
      _
    // Predicated region
    $region18: #{mlp_block.1} parent=1 // pred_check
      _
    $region19: #{mlp_block.1} parent=1 // pred_check_branch
      %52 = sbr.rel (0) target = $region21
    $region20: #{mlp_block.1} parent=1 // pred_region
      _
    $region21: #{mlp_block.1} parent=1 // pred_fallthru
      _
    // Predicated region
    $region22: #{mlp_block.1} parent=1 // pred_check
      _
    $region23: #{mlp_block.1} parent=1 // pred_check_branch
      %54 = sbr.rel (0) target = $region25
    $region24: #{mlp_block.1} parent=1 // pred_region
      %55 = dma.done [#allocation4], 256
    $region25: #{mlp_block.1} parent=1 // pred_fallthru
      _
    // Predicated region
    $region26: #{mlp_block.1} parent=1 // pred_check
      _
    $region27: #{mlp_block.1} parent=1 // pred_check_branch
      %57 = sbr.rel (0) target = $region29
    $region28: #{mlp_block.1} parent=1 // pred_region
      %58 = dma.done [#allocation7], 4096
    $region29: #{mlp_block.1} parent=1 // pred_fallthru
      _
    // Predicated region
    $region30: #{mlp_block.1} parent=1 // pred_check
      _
    $region31: #{mlp_block.1} parent=1 // pred_check_branch
      %60 = sbr.rel (0) target = $region33
    $region32: #{mlp_block.1} parent=1 // pred_region
      %61 = dma.done [#allocation7], 4096
    $region33: #{mlp_block.1} parent=1 // pred_fallthru
      _
    %v63 = vld [vmem:[#allocation3] sm:$0xff]
    %v64 = vld [vmem:[#allocation3 + $0x8] sm:$0xff]
    %v65 = vpack.c.bf16 %v64, %v63
    %v66 = vld [vmem:[#allocation6] sm:$0xff]
    %v67 = vld [vmem:[#allocation6 + $0x8] sm:$0xff]
    %v68 = vld [vmem:[#allocation6 + $0x10] sm:$0xff]
    %v69 = vld [vmem:[#allocation6 + $0x18] sm:$0xff]
    %v70 = vld [vmem:[#allocation6 + $0x20] sm:$0xff]
    %v71 = vld [vmem:[#allocation6 + $0x28] sm:$0xff]
    %v72 = vld [vmem:[#allocation6 + $0x30] sm:$0xff]
    %v73 = vld [vmem:[#allocation6 + $0x38] sm:$0xff]
    %v74 = vld [vmem:[#allocation6 + $0x40] sm:$0xff]
    %v75 = vld [vmem:[#allocation6 + $0x48] sm:$0xff]
    %v76 = vld [vmem:[#allocation6 + $0x50] sm:$0xff]
    %v77 = vld [vmem:[#allocation6 + $0x58] sm:$0xff]
    %v78 = vld [vmem:[#allocation6 + $0x60] sm:$0xff]
    %v79 = vld [vmem:[#allocation6 + $0x68] sm:$0xff]
    %v80 = vld [vmem:[#allocation6 + $0x70] sm:$0xff]
    %v81 = vld [vmem:[#allocation6 + $0x78] sm:$0xff]
    %v82 = vld [vmem:[#allocation6 + $0x80] sm:$0xff]
    %v83 = vld [vmem:[#allocation6 + $0x88] sm:$0xff]
    %v84 = vld [vmem:[#allocation6 + $0x90] sm:$0xff]
    %v85 = vld [vmem:[#allocation6 + $0x98] sm:$0xff]
    %v86 = vld [vmem:[#allocation6 + $0xa0] sm:$0xff]
    %v87 = vld [vmem:[#allocation6 + $0xa8] sm:$0xff]
    %v88 = vld [vmem:[#allocation6 + $0xb0] sm:$0xff]
    %v89 = vld [vmem:[#allocation6 + $0xb8] sm:$0xff]
    %v90 = vld [vmem:[#allocation6 + $0xc0] sm:$0xff]
    %v91 = vld [vmem:[#allocation6 + $0xc8] sm:$0xff]
    %v92 = vld [vmem:[#allocation6 + $0xd0] sm:$0xff]
    %v93 = vld [vmem:[#allocation6 + $0xd8] sm:$0xff]
    %v94 = vld [vmem:[#allocation6 + $0xe0] sm:$0xff]
    %v95 = vld [vmem:[#allocation6 + $0xe8] sm:$0xff]
    %v96 = vld [vmem:[#allocation6 + $0xf0] sm:$0xff]
    %v97 = vld [vmem:[#allocation6 + $0xf8] sm:$0xff]
    %v98 = vld [vmem:[%s2] sm:$0xf]
    %v99 = vld [vmem:[#allocation8] sm:$0xf]
    %v100 = vld [vmem:[#allocation8 + $0x4] sm:$0xf]
    %v101 = vld [vmem:[#allocation8 + $0x8] sm:$0xf]
    %v102 = vld [vmem:[#allocation8 + $0xc] sm:$0xf]
    %v103 = vld [vmem:[#allocation8 + $0x10] sm:$0xf]
    %v104 = vld [vmem:[#allocation8 + $0x14] sm:$0xf]
    %v105 = vld [vmem:[#allocation8 + $0x18] sm:$0xf]
    %v106 = vld [vmem:[#allocation8 + $0x1c] sm:$0xf]
    %v107 = vld [vmem:[#allocation8 + $0x20] sm:$0xf]
    %v108 = vld [vmem:[#allocation8 + $0x24] sm:$0xf]
    %v109 = vld [vmem:[#allocation8 + $0x28] sm:$0xf]
    %v110 = vld [vmem:[#allocation8 + $0x2c] sm:$0xf]
    %v111 = vld [vmem:[#allocation8 + $0x30] sm:$0xf]
    %v112 = vld [vmem:[#allocation8 + $0x34] sm:$0xf]
    %v113 = vld [vmem:[#allocation8 + $0x38] sm:$0xf]
    %v114 = vld [vmem:[#allocation8 + $0x3c] sm:$0xf]
    %v115 = vld [vmem:[#allocation8 + $0x40] sm:$0xf]
    %v116 = vld [vmem:[#allocation8 + $0x44] sm:$0xf]
    %v117 = vld [vmem:[#allocation8 + $0x48] sm:$0xf]
    %v118 = vld [vmem:[#allocation8 + $0x4c] sm:$0xf]
    %v119 = vld [vmem:[#allocation8 + $0x50] sm:$0xf]
    %v120 = vld [vmem:[#allocation8 + $0x54] sm:$0xf]
    %v121 = vld [vmem:[#allocation8 + $0x58] sm:$0xf]
    %v122 = vld [vmem:[#allocation8 + $0x5c] sm:$0xf]
    %v123 = vld [vmem:[#allocation8 + $0x60] sm:$0xf]
    %v124 = vld [vmem:[#allocation8 + $0x64] sm:$0xf]
    %v125 = vld [vmem:[#allocation8 + $0x68] sm:$0xf]
    %v126 = vld [vmem:[#allocation8 + $0x6c] sm:$0xf]
    %v127 = vld [vmem:[#allocation8 + $0x70] sm:$0xf]
    %v128 = vld [vmem:[#allocation8 + $0x74] sm:$0xf]
    %v129 = vld [vmem:[#allocation8 + $0x78] sm:$0xf]
    %v130 = vld [vmem:[#allocation8 + $0x7c] sm:$0xf]
    %v131 = vld [vmem:[#allocation8 + $0x80] sm:$0xf]
    %v132 = vld [vmem:[#allocation8 + $0x84] sm:$0xf]
    %v133 = vld [vmem:[#allocation8 + $0x88] sm:$0xf]
    %v134 = vld [vmem:[#allocation8 + $0x8c] sm:$0xf]
    %v135 = vld [vmem:[#allocation8 + $0x90] sm:$0xf]
    %v136 = vld [vmem:[#allocation8 + $0x94] sm:$0xf]
    %v137 = vld [vmem:[#allocation8 + $0x98] sm:$0xf]
    %v138 = vld [vmem:[#allocation8 + $0x9c] sm:$0xf]
    %v139 = vld [vmem:[#allocation8 + $0xa0] sm:$0xf]
    %v140 = vld [vmem:[#allocation8 + $0xa4] sm:$0xf]
    %v141 = vld [vmem:[#allocation8 + $0xa8] sm:$0xf]
    %v142 = vld [vmem:[#allocation8 + $0xac] sm:$0xf]
    %v143 = vld [vmem:[#allocation8 + $0xb0] sm:$0xf]
    %v144 = vld [vmem:[#allocation8 + $0xb4] sm:$0xf]
    %v145 = vld [vmem:[#allocation8 + $0xb8] sm:$0xf]
    %v146 = vld [vmem:[#allocation8 + $0xbc] sm:$0xf]
    %v147 = vld [vmem:[#allocation8 + $0xc0] sm:$0xf]
    %v148 = vld [vmem:[#allocation8 + $0xc4] sm:$0xf]
    %v149 = vld [vmem:[#allocation8 + $0xc8] sm:$0xf]
    %v150 = vld [vmem:[#allocation8 + $0xcc] sm:$0xf]
    %v151 = vld [vmem:[#allocation8 + $0xd0] sm:$0xf]
    %v152 = vld [vmem:[#allocation8 + $0xd4] sm:$0xf]
    %v153 = vld [vmem:[#allocation8 + $0xd8] sm:$0xf]
    %v154 = vld [vmem:[#allocation8 + $0xdc] sm:$0xf]
    %v155 = vld [vmem:[#allocation8 + $0xe0] sm:$0xf]
    %v156 = vld [vmem:[#allocation8 + $0xe4] sm:$0xf]
    %v157 = vld [vmem:[#allocation8 + $0xe8] sm:$0xf]
    %v158 = vld [vmem:[#allocation8 + $0xec] sm:$0xf]
    %v159 = vld [vmem:[#allocation8 + $0xf0] sm:$0xf]
    %v160 = vld [vmem:[#allocation8 + $0xf4] sm:$0xf]
    %v161 = vld [vmem:[#allocation8 + $0xf8] sm:$0xf]
    %v162 = vld [vmem:[#allocation8 + $0xfc] sm:$0xf]
    %v164 = vlaneseq
    %v165 = vshrl.u32 %v164, 7
    %v166 = vsub.s32 0, %v165
    %v167 = vrot.slane %v98, %v166
    %v168 = vlaneseq
    %v169 = vshrl.u32 %v168, 7
    %v170 = vsub.s32 1, %v169
    %v171 = vrot.slane %v98, %v170
    %v172 = vlaneseq
    %v173 = vshrl.u32 %v172, 7
    %v174 = vsub.s32 2, %v173
    %v175 = vrot.slane %v98, %v174
    %v176 = vlaneseq
    %v177 = vshrl.u32 %v176, 7
    %v178 = vsub.s32 3, %v177
    %v179 = vrot.slane %v98, %v178
    %v216 = vunpack.c.l.b16 %v66
    %v217 = vunpack.c.h.b16 %v66
    %v218 = vunpack.c.l.b16 %v67
    %v219 = vunpack.c.h.b16 %v67
    %v220 = vunpack.c.l.b16 %v68
    %v221 = vunpack.c.h.b16 %v68
    %v222 = vunpack.c.l.b16 %v69
    %v223 = vunpack.c.h.b16 %v69
    %v224 = vunpack.c.l.b16 %v70
    %v225 = vunpack.c.h.b16 %v70
    %v226 = vunpack.c.l.b16 %v71
    %v227 = vunpack.c.h.b16 %v71
    %v228 = vunpack.c.l.b16 %v72
    %v229 = vunpack.c.h.b16 %v72
    %v230 = vunpack.c.l.b16 %v73
    %v231 = vunpack.c.h.b16 %v73
    %v232 = vunpack.c.l.b16 %v74
    %v233 = vunpack.c.h.b16 %v74
    %v234 = vunpack.c.l.b16 %v75
    %v235 = vunpack.c.h.b16 %v75
    %v236 = vunpack.c.l.b16 %v76
    %v237 = vunpack.c.h.b16 %v76
    %v238 = vunpack.c.l.b16 %v77
    %v239 = vunpack.c.h.b16 %v77
    %v240 = vunpack.c.l.b16 %v78
    %v241 = vunpack.c.h.b16 %v78
    %v242 = vunpack.c.l.b16 %v79
    %v243 = vunpack.c.h.b16 %v79
    %v244 = vunpack.c.l.b16 %v80
    %v245 = vunpack.c.h.b16 %v80
    %v246 = vunpack.c.l.b16 %v81
    %v247 = vunpack.c.h.b16 %v81
    %v248 = vunpack.c.l.b16 %v82
    %v249 = vunpack.c.h.b16 %v82
    %v250 = vunpack.c.l.b16 %v83
    %v251 = vunpack.c.h.b16 %v83
    %v252 = vunpack.c.l.b16 %v84
    %v253 = vunpack.c.h.b16 %v84
    %v254 = vunpack.c.l.b16 %v85
    %v255 = vunpack.c.h.b16 %v85
    %v256 = vunpack.c.l.b16 %v86
    %v257 = vunpack.c.h.b16 %v86
    %v258 = vunpack.c.l.b16 %v87
    %v259 = vunpack.c.h.b16 %v87
    %v260 = vunpack.c.l.b16 %v88
    %v261 = vunpack.c.h.b16 %v88
    %v262 = vunpack.c.l.b16 %v89
    %v263 = vunpack.c.h.b16 %v89
    %v264 = vunpack.c.l.b16 %v90
    %v265 = vunpack.c.h.b16 %v90
    %v266 = vunpack.c.l.b16 %v91
    %v267 = vunpack.c.h.b16 %v91
    %v268 = vunpack.c.l.b16 %v92
    %v269 = vunpack.c.h.b16 %v92
    %v270 = vunpack.c.l.b16 %v93
    %v271 = vunpack.c.h.b16 %v93
    %v272 = vunpack.c.l.b16 %v94
    %v273 = vunpack.c.h.b16 %v94
    %v274 = vunpack.c.l.b16 %v95
    %v275 = vunpack.c.h.b16 %v95
    %v276 = vunpack.c.l.b16 %v96
    %v277 = vunpack.c.h.b16 %v96
    %v278 = vunpack.c.l.b16 %v97
    %v279 = vunpack.c.h.b16 %v97
    %v280 = vpack.c.b16 %v220, %v216
    %v281 = vpack.c.b16 %v221, %v217
    %v282 = vpack.c.b16 %v222, %v218
    %v283 = vpack.c.b16 %v223, %v219
    %v284 = vpack.c.b16 %v228, %v224
    %v285 = vpack.c.b16 %v229, %v225
    %v286 = vpack.c.b16 %v230, %v226
    %v287 = vpack.c.b16 %v231, %v227
    %v288 = vpack.c.b16 %v236, %v232
    %v289 = vpack.c.b16 %v237, %v233
    %v290 = vpack.c.b16 %v238, %v234
    %v291 = vpack.c.b16 %v239, %v235
    %v292 = vpack.c.b16 %v244, %v240
    %v293 = vpack.c.b16 %v245, %v241
    %v294 = vpack.c.b16 %v246, %v242
    %v295 = vpack.c.b16 %v247, %v243
    %v296 = vpack.c.b16 %v252, %v248
    %v297 = vpack.c.b16 %v253, %v249
    %v298 = vpack.c.b16 %v254, %v250
    %v299 = vpack.c.b16 %v255, %v251
    %v300 = vpack.c.b16 %v260, %v256
    %v301 = vpack.c.b16 %v261, %v257
    %v302 = vpack.c.b16 %v262, %v258
    %v303 = vpack.c.b16 %v263, %v259
    %v304 = vpack.c.b16 %v268, %v264
    %v305 = vpack.c.b16 %v269, %v265
    %v306 = vpack.c.b16 %v270, %v266
    %v307 = vpack.c.b16 %v271, %v267
    %v308 = vpack.c.b16 %v276, %v272
    %v309 = vpack.c.b16 %v277, %v273
    %v310 = vpack.c.b16 %v278, %v274
    %v311 = vpack.c.b16 %v279, %v275
    %344 = vmatprep.subr.bf16.mxu0 %v281
    %345 = vmatpush1.bf16.msra.mxu0 %v280
    %346 = vmatprep.subr.bf16.mxu0 %v285
    %347 = vmatpush1.bf16.msra.mxu0 %v284
    %348 = vmatprep.subr.bf16.mxu0 %v289
    %349 = vmatpush1.bf16.msra.mxu0 %v288
    %350 = vmatprep.subr.bf16.mxu0 %v293
    %351 = vmatpush1.bf16.msra.mxu0 %v292
    %352 = vmatprep.subr.bf16.mxu0 %v297
    %353 = vmatpush1.bf16.msra.mxu0 %v296
    %354 = vmatprep.subr.bf16.mxu0 %v301
    %355 = vmatpush1.bf16.msra.mxu0 %v300
    %356 = vmatprep.subr.bf16.mxu0 %v305
    %357 = vmatpush1.bf16.msra.mxu0 %v304
    %358 = vmatprep.subr.bf16.mxu0 %v309
    %359 = vmatpush1.bf16.msra.mxu0 %v308
    %360 = vmatprep.subr.bf16.mxu0 0
    %361 = vmatpush1.bf16.msra.mxu0 0
    %362 = vmatprep.subr.bf16.mxu0 0
    %363 = vmatpush1.bf16.msra.mxu0 0
    %364 = vmatprep.subr.bf16.mxu0 0
    %365 = vmatpush1.bf16.msra.mxu0 0
    %366 = vmatprep.subr.bf16.mxu0 0
    %367 = vmatpush1.bf16.msra.mxu0 0
    %368 = vmatprep.subr.bf16.mxu0 0
    %369 = vmatpush1.bf16.msra.mxu0 0
    %370 = vmatprep.subr.bf16.mxu0 0
    %371 = vmatpush1.bf16.msra.mxu0 0
    %372 = vmatprep.subr.bf16.mxu0 0
    %373 = vmatpush1.bf16.msra.mxu0 0
    %374 = vmatprep.subr.bf16.mxu0 0
    %375 = vmatpush1.bf16.msra.mxu0 0
    %376 = vmatprep.mubr.bf16.mxu0 0
    %377 = vmatmul.mubr.bf16.gmra.mrb[0].mxu0 %v65
    %v378 = vpop.f32.mrb[0].mxu0
    %v379 = vadd.f32 %v167, %v378
    %v380 = vpop.f32.mrb[0].mxu0
    %v381 = vadd.f32 %v171, %v380
    %v382 = vpop.f32.mrb[0].mxu0
    %v383 = vadd.f32 %v167, %v382
    %v384 = vpop.f32.mrb[0].mxu0
    %v385 = vadd.f32 %v171, %v384
    %386 = vdwg.mxu0
    %387 = vmatprep.subr.bf16.mxu0 %v283
    %388 = vmatpush1.bf16.msra.mxu0 %v282
    %389 = vmatprep.subr.bf16.mxu0 %v287
    %390 = vmatpush1.bf16.msra.mxu0 %v286
    %391 = vmatprep.subr.bf16.mxu0 %v291
    %392 = vmatpush1.bf16.msra.mxu0 %v290
    %393 = vmatprep.subr.bf16.mxu0 %v295
    %394 = vmatpush1.bf16.msra.mxu0 %v294
    %395 = vmatprep.subr.bf16.mxu0 %v299
    %396 = vmatpush1.bf16.msra.mxu0 %v298
    %397 = vmatprep.subr.bf16.mxu0 %v303
    %398 = vmatpush1.bf16.msra.mxu0 %v302
    %399 = vmatprep.subr.bf16.mxu0 %v307
    %400 = vmatpush1.bf16.msra.mxu0 %v306
    %401 = vmatprep.subr.bf16.mxu0 %v311
    %402 = vmatpush1.bf16.msra.mxu0 %v310
    %403 = vmatprep.subr.bf16.mxu0 0
    %404 = vmatpush1.bf16.msra.mxu0 0
    %405 = vmatprep.subr.bf16.mxu0 0
    %406 = vmatpush1.bf16.msra.mxu0 0
    %407 = vmatprep.subr.bf16.mxu0 0
    %408 = vmatpush1.bf16.msra.mxu0 0
    %409 = vmatprep.subr.bf16.mxu0 0
    %410 = vmatpush1.bf16.msra.mxu0 0
    %411 = vmatprep.subr.bf16.mxu0 0
    %412 = vmatpush1.bf16.msra.mxu0 0
    %413 = vmatprep.subr.bf16.mxu0 0
    %414 = vmatpush1.bf16.msra.mxu0 0
    %415 = vmatprep.subr.bf16.mxu0 0
    %416 = vmatpush1.bf16.msra.mxu0 0
    %417 = vmatprep.subr.bf16.mxu0 0
    %418 = vmatpush1.bf16.msra.mxu0 0
    %419 = vmatprep.mubr.bf16.mxu0 0
    %420 = vmatmul.mubr.bf16.gmra.mrb[0].mxu0 %v65
    %v421 = vpop.f32.mrb[0].mxu0
    %v422 = vadd.f32 %v175, %v421
    %v423 = vpop.f32.mrb[0].mxu0
    %v424 = vadd.f32 %v179, %v423
    %v425 = vpop.f32.mrb[0].mxu0
    %v426 = vadd.f32 %v175, %v425
    %v427 = vpop.f32.mrb[0].mxu0
    %v428 = vadd.f32 %v179, %v427
    %429 = vdwg.mxu0
    %v430 = vmul.f32 %v379, 0.5
    %v431 = vmul.f32 %v381, 0.5
    %v432 = vmul.f32 %v422, 0.5
    %v433 = vmul.f32 %v424, 0.5
    %v434 = vmul.f32 %v383, 0.5
    %v435 = vmul.f32 %v385, 0.5
    %v436 = vmul.f32 %v426, 0.5
    %v437 = vmul.f32 %v428, 0.5
    %v438 = vmul.f32 %v379, 0.70710677
    %v439 = vmul.f32 %v381, 0.70710677
    %v440 = vmul.f32 %v422, 0.70710677
    %v441 = vmul.f32 %v424, 0.70710677
    %v442 = vmul.f32 %v383, 0.70710677
    %v443 = vmul.f32 %v385, 0.70710677
    %v444 = vmul.f32 %v426, 0.70710677
    %v445 = vmul.f32 %v428, 0.70710677
    %v446 = verf.f32.pop %v438
    %v447 = verf.f32.pop %v439
    %v448 = verf.f32.pop %v440
    %v449 = verf.f32.pop %v441
    %v450 = verf.f32.pop %v442
    %v451 = verf.f32.pop %v443
    %v452 = verf.f32.pop %v444
    %v453 = verf.f32.pop %v445
    %v454 = vadd.f32 %v446, 1.0
    %v455 = vadd.f32 %v447, 1.0
    %v456 = vadd.f32 %v448, 1.0
    %v457 = vadd.f32 %v449, 1.0
    %v458 = vadd.f32 %v450, 1.0
    %v459 = vadd.f32 %v451, 1.0
    %v460 = vadd.f32 %v452, 1.0
    %v461 = vadd.f32 %v453, 1.0
    %v462 = vmul.f32 %v430, %v454
    %v463 = vmul.f32 %v431, %v455
    %v464 = vmul.f32 %v432, %v456
    %v465 = vmul.f32 %v433, %v457
    %v466 = vmul.f32 %v434, %v458
    %v467 = vmul.f32 %v435, %v459
    %v468 = vmul.f32 %v436, %v460
    %v469 = vmul.f32 %v437, %v461
    %v470 = vpack.c.bf16 %v466, %v462
    %v471 = vpack.c.bf16 %v467, %v463
    %v472 = vpack.c.bf16 %v468, %v464
    %v473 = vpack.c.bf16 %v469, %v465
    %v474 = vld [vmem:[%s4] sm:$0x1]
    %v476 = vlaneseq
    %v477 = vshrl.u32 %v476, 7
    %v478 = vsub.s32 0, %v477
    %v479 = vrot.slane %v474, %v478
    %v545 = vunpack.c.l.b16 %v99
    %v546 = vunpack.c.l.b16 %v100
    %v547 = vunpack.c.l.b16 %v101
    %v548 = vunpack.c.l.b16 %v102
    %v549 = vunpack.c.l.b16 %v103
    %v550 = vunpack.c.l.b16 %v104
    %v551 = vunpack.c.l.b16 %v105
    %v552 = vunpack.c.l.b16 %v106
    %v553 = vunpack.c.l.b16 %v107
    %v554 = vunpack.c.l.b16 %v108
    %v555 = vunpack.c.l.b16 %v109
    %v556 = vunpack.c.l.b16 %v110
    %v557 = vunpack.c.l.b16 %v111
    %v558 = vunpack.c.l.b16 %v112
    %v559 = vunpack.c.l.b16 %v113
    %v560 = vunpack.c.l.b16 %v114
    %v561 = vunpack.c.l.b16 %v115
    %v562 = vunpack.c.l.b16 %v116
    %v563 = vunpack.c.l.b16 %v117
    %v564 = vunpack.c.l.b16 %v118
    %v565 = vunpack.c.l.b16 %v119
    %v566 = vunpack.c.l.b16 %v120
    %v567 = vunpack.c.l.b16 %v121
    %v568 = vunpack.c.l.b16 %v122
    %v569 = vunpack.c.l.b16 %v123
    %v570 = vunpack.c.l.b16 %v124
    %v571 = vunpack.c.l.b16 %v125
    %v572 = vunpack.c.l.b16 %v126
    %v573 = vunpack.c.l.b16 %v127
    %v574 = vunpack.c.l.b16 %v128
    %v575 = vunpack.c.l.b16 %v129
    %v576 = vunpack.c.l.b16 %v130
    %v577 = vunpack.c.l.b16 %v131
    %v578 = vunpack.c.l.b16 %v132
    %v579 = vunpack.c.l.b16 %v133
    %v580 = vunpack.c.l.b16 %v134
    %v581 = vunpack.c.l.b16 %v135
    %v582 = vunpack.c.l.b16 %v136
    %v583 = vunpack.c.l.b16 %v137
    %v584 = vunpack.c.l.b16 %v138
    %v585 = vunpack.c.l.b16 %v139
    %v586 = vunpack.c.l.b16 %v140
    %v587 = vunpack.c.l.b16 %v141
    %v588 = vunpack.c.l.b16 %v142
    %v589 = vunpack.c.l.b16 %v143
    %v590 = vunpack.c.l.b16 %v144
    %v591 = vunpack.c.l.b16 %v145
    %v592 = vunpack.c.l.b16 %v146
    %v593 = vunpack.c.l.b16 %v147
    %v594 = vunpack.c.l.b16 %v148
    %v595 = vunpack.c.l.b16 %v149
    %v596 = vunpack.c.l.b16 %v150
    %v597 = vunpack.c.l.b16 %v151
    %v598 = vunpack.c.l.b16 %v152
    %v599 = vunpack.c.l.b16 %v153
    %v600 = vunpack.c.l.b16 %v154
    %v601 = vunpack.c.l.b16 %v155
    %v602 = vunpack.c.l.b16 %v156
    %v603 = vunpack.c.l.b16 %v157
    %v604 = vunpack.c.l.b16 %v158
    %v605 = vunpack.c.l.b16 %v159
    %v606 = vunpack.c.l.b16 %v160
    %v607 = vunpack.c.l.b16 %v161
    %v608 = vunpack.c.l.b16 %v162
    %v609 = vpack.c.b16 %v546, %v545
    %v610 = vpack.c.b16 %v548, %v547
    %v611 = vpack.c.b16 %v550, %v549
    %v612 = vpack.c.b16 %v552, %v551
    %v613 = vpack.c.b16 %v554, %v553
    %v614 = vpack.c.b16 %v556, %v555
    %v615 = vpack.c.b16 %v558, %v557
    %v616 = vpack.c.b16 %v560, %v559
    %v617 = vpack.c.b16 %v562, %v561
    %v618 = vpack.c.b16 %v564, %v563
    %v619 = vpack.c.b16 %v566, %v565
    %v620 = vpack.c.b16 %v568, %v567
    %v621 = vpack.c.b16 %v570, %v569
    %v622 = vpack.c.b16 %v572, %v571
    %v623 = vpack.c.b16 %v574, %v573
    %v624 = vpack.c.b16 %v576, %v575
    %v625 = vpack.c.b16 %v578, %v577
    %v626 = vpack.c.b16 %v580, %v579
    %v627 = vpack.c.b16 %v582, %v581
    %v628 = vpack.c.b16 %v584, %v583
    %v629 = vpack.c.b16 %v586, %v585
    %v630 = vpack.c.b16 %v588, %v587
    %v631 = vpack.c.b16 %v590, %v589
    %v632 = vpack.c.b16 %v592, %v591
    %v633 = vpack.c.b16 %v594, %v593
    %v634 = vpack.c.b16 %v596, %v595
    %v635 = vpack.c.b16 %v598, %v597
    %v636 = vpack.c.b16 %v600, %v599
    %v637 = vpack.c.b16 %v602, %v601
    %v638 = vpack.c.b16 %v604, %v603
    %v639 = vpack.c.b16 %v606, %v605
    %v640 = vpack.c.b16 %v608, %v607
    %673 = vmatprep.subr.bf16.mxu0 0
    %674 = vmatpush1.bf16.msra.mxu0 %v609
    %675 = vmatprep.subr.bf16.mxu0 0
    %676 = vmatpush1.bf16.msra.mxu0 %v610
    %677 = vmatprep.subr.bf16.mxu0 0
    %678 = vmatpush1.bf16.msra.mxu0 %v611
    %679 = vmatprep.subr.bf16.mxu0 0
    %680 = vmatpush1.bf16.msra.mxu0 %v612
    %681 = vmatprep.subr.bf16.mxu0 0
    %682 = vmatpush1.bf16.msra.mxu0 %v613
    %683 = vmatprep.subr.bf16.mxu0 0
    %684 = vmatpush1.bf16.msra.mxu0 %v614
    %685 = vmatprep.subr.bf16.mxu0 0
    %686 = vmatpush1.bf16.msra.mxu0 %v615
    %687 = vmatprep.subr.bf16.mxu0 0
    %688 = vmatpush1.bf16.msra.mxu0 %v616
    %689 = vmatprep.subr.bf16.mxu0 0
    %690 = vmatpush1.bf16.msra.mxu0 %v617
    %691 = vmatprep.subr.bf16.mxu0 0
    %692 = vmatpush1.bf16.msra.mxu0 %v618
    %693 = vmatprep.subr.bf16.mxu0 0
    %694 = vmatpush1.bf16.msra.mxu0 %v619
    %695 = vmatprep.subr.bf16.mxu0 0
    %696 = vmatpush1.bf16.msra.mxu0 %v620
    %697 = vmatprep.subr.bf16.mxu0 0
    %698 = vmatpush1.bf16.msra.mxu0 %v621
    %699 = vmatprep.subr.bf16.mxu0 0
    %700 = vmatpush1.bf16.msra.mxu0 %v622
    %701 = vmatprep.subr.bf16.mxu0 0
    %702 = vmatpush1.bf16.msra.mxu0 %v623
    %703 = vmatprep.subr.bf16.mxu0 0
    %704 = vmatpush1.bf16.msra.mxu0 %v624
    %705 = vmatprep.mubr.bf16.mxu0 %v471
    %706 = vmatmul.mubr.bf16.gmra.mrb[0].mxu0 %v470
    %v707 = vpop.f32.mrb[0].mxu0
    %v708 = vadd.f32 %v479, %v707
    %v709 = vpop.f32.mrb[0].mxu0
    %v710 = vpop.f32.mrb[0].mxu0
    %v711 = vadd.f32 %v479, %v710
    %v712 = vpop.f32.mrb[0].mxu0
    %713 = vdwg.mxu0
    %714 = vmatprep.subr.bf16.mxu0 0
    %715 = vmatpush1.bf16.msra.mxu0 %v625
    %716 = vmatprep.subr.bf16.mxu0 0
    %717 = vmatpush1.bf16.msra.mxu0 %v626
    %718 = vmatprep.subr.bf16.mxu0 0
    %719 = vmatpush1.bf16.msra.mxu0 %v627
    %720 = vmatprep.subr.bf16.mxu0 0
    %721 = vmatpush1.bf16.msra.mxu0 %v628
    %722 = vmatprep.subr.bf16.mxu0 0
    %723 = vmatpush1.bf16.msra.mxu0 %v629
    %724 = vmatprep.subr.bf16.mxu0 0
    %725 = vmatpush1.bf16.msra.mxu0 %v630
    %726 = vmatprep.subr.bf16.mxu0 0
    %727 = vmatpush1.bf16.msra.mxu0 %v631
    %728 = vmatprep.subr.bf16.mxu0 0
    %729 = vmatpush1.bf16.msra.mxu0 %v632
    %730 = vmatprep.subr.bf16.mxu0 0
    %731 = vmatpush1.bf16.msra.mxu0 %v633
    %732 = vmatprep.subr.bf16.mxu0 0
    %733 = vmatpush1.bf16.msra.mxu0 %v634
    %734 = vmatprep.subr.bf16.mxu0 0
    %735 = vmatpush1.bf16.msra.mxu0 %v635
    %736 = vmatprep.subr.bf16.mxu0 0
    %737 = vmatpush1.bf16.msra.mxu0 %v636
    %738 = vmatprep.subr.bf16.mxu0 0
    %739 = vmatpush1.bf16.msra.mxu0 %v637
    %740 = vmatprep.subr.bf16.mxu0 0
    %741 = vmatpush1.bf16.msra.mxu0 %v638
    %742 = vmatprep.subr.bf16.mxu0 0
    %743 = vmatpush1.bf16.msra.mxu0 %v639
    %744 = vmatprep.subr.bf16.mxu0 0
    %745 = vmatpush1.bf16.msra.mxu0 %v640
    %746 = vmatprep.mubr.bf16.mxu0 %v473
    %747 = vmatmul.mubr.bf16.gmra.mrb[0].mxu0 %v472
    %v748 = vpop.f32.mrb[0].mxu0
    %v749 = vadd.f32 %v708, %v748
    %v750 = vpop.f32.mrb[0].mxu0
    %v751 = vpop.f32.mrb[0].mxu0
    %v752 = vadd.f32 %v711, %v751
    %v753 = vpop.f32.mrb[0].mxu0
    %754 = vdwg.mxu0
    %755 = vst [vmem:[#allocation9] sm:$0xff] %v749
    %756 = vst [vmem:[#allocation9 + $0x8] sm:$0xff] %v752
    // Predicated region
    $region34: #{mlp_block.1} parent=1 // pred_check
      _
    $region35: #{mlp_block.1} parent=1 // pred_check_branch
      %758 = sbr.rel (0) target = $region37
    $region36: #{mlp_block.1} parent=1 // pred_region
      %s760 = ssub.s32 256, 256
      %761 = vsyncadd [#allocation5], %s760
      %s762 = sshll.u32 [#allocation9], 4
      %s763 = int_to_ptr.vmem [resolvable:$true] %s762
      %768 = dma.vmem_to_hbm [thread:$0]  %s763, 256, %s5, [#allocation5], 128, 128, 8
    $region37: #{mlp_block.1} parent=1 // pred_fallthru
      _
    // Predicated region
    $region38: #{mlp_block.1} parent=1 // pred_check
      _
    $region39: #{mlp_block.1} parent=1 // pred_check_branch
      %770 = sbr.rel (0) target = $region41
    $region40: #{mlp_block.1} parent=1 // pred_region
      %771 = dma.done [#allocation5], 256
    $region41: #{mlp_block.1} parent=1 // pred_fallthru
      _
    %772 = vsyncpa [#allocation4], 1
    %773 = vsyncpa [#allocation7], 1
    %774 = vsyncpa [#allocation5], 1

</llo_original>
